<compile_context>
chip_gen: v5e
topology: v5e:2x2
jax: 0.10.0
libtpu: 0.0.40
codegen_flags: <defaults>
</compile_context>

<pallas_src>
import math
import jax
import jax.numpy as jnp
from jax.experimental import pallas as pl
from jax.experimental.pallas import tpu as pltpu

LAYER_DIMS = [27, 100, 100, 100, 100, 100, 100, 1]  # 7 Linear layers
PAD_F = 128                                          # lane-padded feature dim


def _mlp_kernel(x_ref,
                w1, b1, w2, b2, w3, b3, w4, b4, w5, b5, w6, b6,
                w7, b7,
                o_ref):
    """Whole MLP forward for one batch tile, fused in a single kernel."""
    h = x_ref[...].astype(jnp.float32)

    def linear_relu(h, w_ref, b_ref):
        # bf16 operands on the MXU, f32 accumulation; bias/ReLU on the VPU in f32.
        y = jnp.dot(h.astype(jnp.bfloat16), w_ref[...],
                    preferred_element_type=jnp.float32)
        y = y + b_ref[...]          # (1, 128) broadcasts over the batch tile
        return jnp.maximum(y, 0.0)  # ReLU

    h = linear_relu(h, w1, b1)
    h = linear_relu(h, w2, b2)
    h = linear_relu(h, w3, b3)
    h = linear_relu(h, w4, b4)
    h = linear_relu(h, w5, b5)
    h = linear_relu(h, w6, b6)

    # Final Linear(100 -> 1), no activation: VPU multiply + lane reduction
    # instead of a wasteful N=1 MXU matmul.  w7 is a zero-padded (1, 128) row.
    y = jnp.sum(h * w7[...], axis=-1, keepdims=True) + b7[...]
    o_ref[...] = y.astype(o_ref.dtype)


def _prepare_params(params):
    """Zero-pad every layer to 128-wide tiles; hidden weights -> bf16.

    Returns a flat list [w1, b1, ..., w7, b7] of padded arrays.
    Zero padding keeps the math identical to the unpadded model (padded
    lanes stay exactly 0 through every layer).
    """
    flat = []
    n = len(params)
    for i, (w, b) in enumerate(params):
        fin, fout = w.shape
        if i < n - 1:
            wp = (jnp.zeros((PAD_F, PAD_F), jnp.float32)
                  .at[:fin, :fout].set(w).astype(jnp.bfloat16))
            bp = jnp.zeros((1, PAD_F), jnp.float32).at[:, :fout].set(
                jnp.reshape(b, (1, fout)))
        else:
            # Final layer weight as a padded f32 row vector, bias as (1, 1).
            wp = jnp.zeros((1, PAD_F), jnp.float32).at[0, :fin].set(w[:, 0])
            bp = jnp.asarray(b, jnp.float32).reshape(1, 1)
        flat += [wp, bp]
    return flat


def nn_forward(x, params, *, tile_b=256):
    """x: (B, 27) float32.  params: list of (W (in,out), b (1,out))."""
    B, F = x.shape
    assert F == LAYER_DIMS[0]

    # Pick a batch tile: default 256 (good MXU M-streaming on v5e/v6e/v7x);
    # shrink to a multiple of 8 for tiny batches.  Pad the batch so the grid
    # divides evenly -- padded rows are zero and sliced off at the end.
    tile_b = max(8, ((tile_b + 7) // 8) * 8)
    if B <= tile_b:
        tile_b = max(8, ((B + 7) // 8) * 8)
    b_pad = ((B + tile_b - 1) // tile_b) * tile_b
    grid = (b_pad // tile_b,)

    # Zero-pad input to (b_pad, 128): lane-dense, (8,128)-aligned.
    xp = jnp.zeros((b_pad, PAD_F), jnp.float32).at[:B, :F].set(x)

    flat_params = _prepare_params(params)

    # Input/output tiled over batch; weights/biases are whole-array blocks
    # with a constant index_map -> resident in VMEM across all grid steps.
    in_specs = [pl.BlockSpec((tile_b, PAD_F), lambda i: (i, 0))]
    for arr in flat_params:
        in_specs.append(pl.BlockSpec(arr.shape, lambda i: (0, 0)))

    out_spec = pl.BlockSpec((tile_b, 1), lambda i: (i, 0))

    out = pl.pallas_call(
        _mlp_kernel,
        out_shape=jax.ShapeDtypeStruct((b_pad, 1), jnp.float32),
        grid=grid,
        in_specs=in_specs,
        out_specs=out_spec,
        compiler_params=pltpu.CompilerParams(
            dimension_semantics=("parallel",)),
    )(xp, *flat_params)

    return out[:B]


def init_params(key):
    """Deterministic init mimicking torch.nn.Linear defaults:
    U(-1/sqrt(fan_in), 1/sqrt(fan_in)) for both weight and bias."""
    params = []
    for i in range(len(LAYER_DIMS) - 1):
        fan_in, fan_out = LAYER_DIMS[i], LAYER_DIMS[i + 1]
        key, kw, kb = jax.random.split(key, 3)
        bound = 1.0 / math.sqrt(fan_in)
        w = jax.random.uniform(kw, (fan_in, fan_out), jnp.float32,
                               minval=-bound, maxval=bound)
        b = jax.random.uniform(kb, (1, fan_out), jnp.float32,
                               minval=-bound, maxval=bound)
        params.append((w, b))
    return params


def reference_forward(x, params):
    h = x
    n = len(params)
    for i, (w, b) in enumerate(params):
        h = h @ w + b
        if i < n - 1:
            h = jnp.maximum(h, 0.0)
    return h


if __name__ == "__main__":
    key = jax.random.PRNGKey(0)
    kp, kx1, kx2 = jax.random.split(key, 3)

    params = init_params(kp)

    # Small test matching the module spec (batch=8, features=27).
    B = 8
    x = jax.random.normal(kx1, (B, LAYER_DIMS[0]), jnp.float32)
    out = jax.block_until_ready(nn_forward(x, params))
    ref = reference_forward(x, params)
    assert out.shape == (B, 1), out.shape
    # bf16 matmul operands (f32 accumulation) -> loosened tolerance vs f32 ref.
    assert jnp.allclose(out, ref, atol=5e-2, rtol=5e-2), (
        float(jnp.max(jnp.abs(out - ref))))

    # Second run exercising batch tiling / padding (grid > 1, non-multiple B).
    B2 = 600
    x2 = jax.random.normal(kx2, (B2, LAYER_DIMS[0]), jnp.float32)
    out2 = jax.block_until_ready(nn_forward(x2, params, tile_b=256))
    ref2 = reference_forward(x2, params)
    assert out2.shape == (B2, 1), out2.shape
    assert jnp.allclose(out2, ref2, atol=5e-2, rtol=5e-2), (
        float(jnp.max(jnp.abs(out2 - ref2))))

    print("KERNEL_OK")
</pallas_src>

<mosaic_0001>
module attributes {stable_mosaic.version = 11 : i64} {
  func.func @_mlp_kernel(%arg0: i32, %arg1: memref<8x128xf32, #tpu.memory_space<vmem>>, %arg2: memref<128x128xbf16, #tpu.memory_space<vmem>>, %arg3: memref<1x128xf32, #tpu.memory_space<vmem>>, %arg4: memref<128x128xbf16, #tpu.memory_space<vmem>>, %arg5: memref<1x128xf32, #tpu.memory_space<vmem>>, %arg6: memref<128x128xbf16, #tpu.memory_space<vmem>>, %arg7: memref<1x128xf32, #tpu.memory_space<vmem>>, %arg8: memref<128x128xbf16, #tpu.memory_space<vmem>>, %arg9: memref<1x128xf32, #tpu.memory_space<vmem>>, %arg10: memref<128x128xbf16, #tpu.memory_space<vmem>>, %arg11: memref<1x128xf32, #tpu.memory_space<vmem>>, %arg12: memref<128x128xbf16, #tpu.memory_space<vmem>>, %arg13: memref<1x128xf32, #tpu.memory_space<vmem>>, %arg14: memref<1x128xf32, #tpu.memory_space<vmem>>, %arg15: memref<1x1xf32, #tpu.memory_space<vmem>>, %arg16: memref<8x1xf32, #tpu.memory_space<vmem>>) attributes {dimension_semantics = [#tpu.dimension_semantics<parallel>], iteration_bounds = array<i64: 1>, scalar_prefetch = 0 : i64, scratch_operands = 0 : i64, tpu.core_type = #tpu.core_type<tc>, window_params = [{transform_indices = @transform_0, window_bounds = array<i64: 8, 128>}, {pipeline_mode = #tpu.pipeline_mode<synchronous>, transform_indices = @transform_1, window_bounds = array<i64: 128, 128>}, {pipeline_mode = #tpu.pipeline_mode<synchronous>, transform_indices = @transform_2, window_bounds = array<i64: 1, 128>}, {pipeline_mode = #tpu.pipeline_mode<synchronous>, transform_indices = @transform_3, window_bounds = array<i64: 128, 128>}, {pipeline_mode = #tpu.pipeline_mode<synchronous>, transform_indices = @transform_4, window_bounds = array<i64: 1, 128>}, {pipeline_mode = #tpu.pipeline_mode<synchronous>, transform_indices = @transform_5, window_bounds = array<i64: 128, 128>}, {pipeline_mode = #tpu.pipeline_mode<synchronous>, transform_indices = @transform_6, window_bounds = array<i64: 1, 128>}, {pipeline_mode = #tpu.pipeline_mode<synchronous>, transform_indices = @transform_7, window_bounds = array<i64: 128, 128>}, {pipeline_mode = #tpu.pipeline_mode<synchronous>, transform_indices = @transform_8, window_bounds = array<i64: 1, 128>}, {pipeline_mode = #tpu.pipeline_mode<synchronous>, transform_indices = @transform_9, window_bounds = array<i64: 128, 128>}, {pipeline_mode = #tpu.pipeline_mode<synchronous>, transform_indices = @transform_10, window_bounds = array<i64: 1, 128>}, {pipeline_mode = #tpu.pipeline_mode<synchronous>, transform_indices = @transform_11, window_bounds = array<i64: 128, 128>}, {pipeline_mode = #tpu.pipeline_mode<synchronous>, transform_indices = @transform_12, window_bounds = array<i64: 1, 128>}, {pipeline_mode = #tpu.pipeline_mode<synchronous>, transform_indices = @transform_13, window_bounds = array<i64: 1, 128>}, {pipeline_mode = #tpu.pipeline_mode<synchronous>, transform_indices = @transform_14, window_bounds = array<i64: 1, 1>}, {transform_indices = @transform_15, window_bounds = array<i64: 8, 1>}]} {
    %c0 = arith.constant 0 : index
    %c0_0 = arith.constant 0 : index
    %0 = vector.load %arg1[%c0, %c0_0] : memref<8x128xf32, #tpu.memory_space<vmem>>, vector<8x128xf32>
    %1 = arith.truncf %0 : vector<8x128xf32> to vector<8x128xbf16>
    %c0_1 = arith.constant 0 : index
    %c0_2 = arith.constant 0 : index
    %2 = vector.load %arg2[%c0_1, %c0_2] : memref<128x128xbf16, #tpu.memory_space<vmem>>, vector<128x128xbf16>
    %cst = arith.constant dense<0.000000e+00> : vector<8x128xf32>
    %3 = tpu.matmul %1, %2, %cst {dimension_numbers = #tpu.dot_dimension_numbers<[1], [0], [0], [1], [0, 0, 1, 1], [], []>} : vector<8x128xbf16>, vector<128x128xbf16>, vector<8x128xf32> -> vector<8x128xf32>
    %c0_3 = arith.constant 0 : index
    %c0_4 = arith.constant 0 : index
    %4 = vector.load %arg3[%c0_3, %c0_4] : memref<1x128xf32, #tpu.memory_space<vmem>>, vector<1x128xf32>
    %5 = vector.broadcast %4 : vector<1x128xf32> to vector<8x128xf32>
    %6 = arith.addf %3, %5 : vector<8x128xf32>
    %cst_5 = arith.constant 0.000000e+00 : f32
    %7 = vector.broadcast %cst_5 : f32 to vector<8x128xf32>
    %8 = arith.maximumf %6, %7 : vector<8x128xf32>
    %9 = arith.truncf %8 : vector<8x128xf32> to vector<8x128xbf16>
    %c0_6 = arith.constant 0 : index
    %c0_7 = arith.constant 0 : index
    %10 = vector.load %arg4[%c0_6, %c0_7] : memref<128x128xbf16, #tpu.memory_space<vmem>>, vector<128x128xbf16>
    %cst_8 = arith.constant dense<0.000000e+00> : vector<8x128xf32>
    %11 = tpu.matmul %9, %10, %cst_8 {dimension_numbers = #tpu.dot_dimension_numbers<[1], [0], [0], [1], [0, 0, 1, 1], [], []>} : vector<8x128xbf16>, vector<128x128xbf16>, vector<8x128xf32> -> vector<8x128xf32>
    %c0_9 = arith.constant 0 : index
    %c0_10 = arith.constant 0 : index
    %12 = vector.load %arg5[%c0_9, %c0_10] : memref<1x128xf32, #tpu.memory_space<vmem>>, vector<1x128xf32>
    %13 = vector.broadcast %12 : vector<1x128xf32> to vector<8x128xf32>
    %14 = arith.addf %11, %13 : vector<8x128xf32>
    %cst_11 = arith.constant 0.000000e+00 : f32
    %15 = vector.broadcast %cst_11 : f32 to vector<8x128xf32>
    %16 = arith.maximumf %14, %15 : vector<8x128xf32>
    %17 = arith.truncf %16 : vector<8x128xf32> to vector<8x128xbf16>
    %c0_12 = arith.constant 0 : index
    %c0_13 = arith.constant 0 : index
    %18 = vector.load %arg6[%c0_12, %c0_13] : memref<128x128xbf16, #tpu.memory_space<vmem>>, vector<128x128xbf16>
    %cst_14 = arith.constant dense<0.000000e+00> : vector<8x128xf32>
    %19 = tpu.matmul %17, %18, %cst_14 {dimension_numbers = #tpu.dot_dimension_numbers<[1], [0], [0], [1], [0, 0, 1, 1], [], []>} : vector<8x128xbf16>, vector<128x128xbf16>, vector<8x128xf32> -> vector<8x128xf32>
    %c0_15 = arith.constant 0 : index
    %c0_16 = arith.constant 0 : index
    %20 = vector.load %arg7[%c0_15, %c0_16] : memref<1x128xf32, #tpu.memory_space<vmem>>, vector<1x128xf32>
    %21 = vector.broadcast %20 : vector<1x128xf32> to vector<8x128xf32>
    %22 = arith.addf %19, %21 : vector<8x128xf32>
    %cst_17 = arith.constant 0.000000e+00 : f32
    %23 = vector.broadcast %cst_17 : f32 to vector<8x128xf32>
    %24 = arith.maximumf %22, %23 : vector<8x128xf32>
    %25 = arith.truncf %24 : vector<8x128xf32> to vector<8x128xbf16>
    %c0_18 = arith.constant 0 : index
    %c0_19 = arith.constant 0 : index
    %26 = vector.load %arg8[%c0_18, %c0_19] : memref<128x128xbf16, #tpu.memory_space<vmem>>, vector<128x128xbf16>
    %cst_20 = arith.constant dense<0.000000e+00> : vector<8x128xf32>
    %27 = tpu.matmul %25, %26, %cst_20 {dimension_numbers = #tpu.dot_dimension_numbers<[1], [0], [0], [1], [0, 0, 1, 1], [], []>} : vector<8x128xbf16>, vector<128x128xbf16>, vector<8x128xf32> -> vector<8x128xf32>
    %c0_21 = arith.constant 0 : index
    %c0_22 = arith.constant 0 : index
    %28 = vector.load %arg9[%c0_21, %c0_22] : memref<1x128xf32, #tpu.memory_space<vmem>>, vector<1x128xf32>
    %29 = vector.broadcast %28 : vector<1x128xf32> to vector<8x128xf32>
    %30 = arith.addf %27, %29 : vector<8x128xf32>
    %cst_23 = arith.constant 0.000000e+00 : f32
    %31 = vector.broadcast %cst_23 : f32 to vector<8x128xf32>
    %32 = arith.maximumf %30, %31 : vector<8x128xf32>
    %33 = arith.truncf %32 : vector<8x128xf32> to vector<8x128xbf16>
    %c0_24 = arith.constant 0 : index
    %c0_25 = arith.constant 0 : index
    %34 = vector.load %arg10[%c0_24, %c0_25] : memref<128x128xbf16, #tpu.memory_space<vmem>>, vector<128x128xbf16>
    %cst_26 = arith.constant dense<0.000000e+00> : vector<8x128xf32>
    %35 = tpu.matmul %33, %34, %cst_26 {dimension_numbers = #tpu.dot_dimension_numbers<[1], [0], [0], [1], [0, 0, 1, 1], [], []>} : vector<8x128xbf16>, vector<128x128xbf16>, vector<8x128xf32> -> vector<8x128xf32>
    %c0_27 = arith.constant 0 : index
    %c0_28 = arith.constant 0 : index
    %36 = vector.load %arg11[%c0_27, %c0_28] : memref<1x128xf32, #tpu.memory_space<vmem>>, vector<1x128xf32>
    %37 = vector.broadcast %36 : vector<1x128xf32> to vector<8x128xf32>
    %38 = arith.addf %35, %37 : vector<8x128xf32>
    %cst_29 = arith.constant 0.000000e+00 : f32
    %39 = vector.broadcast %cst_29 : f32 to vector<8x128xf32>
    %40 = arith.maximumf %38, %39 : vector<8x128xf32>
    %41 = arith.truncf %40 : vector<8x128xf32> to vector<8x128xbf16>
    %c0_30 = arith.constant 0 : index
    %c0_31 = arith.constant 0 : index
    %42 = vector.load %arg12[%c0_30, %c0_31] : memref<128x128xbf16, #tpu.memory_space<vmem>>, vector<128x128xbf16>
    %cst_32 = arith.constant dense<0.000000e+00> : vector<8x128xf32>
    %43 = tpu.matmul %41, %42, %cst_32 {dimension_numbers = #tpu.dot_dimension_numbers<[1], [0], [0], [1], [0, 0, 1, 1], [], []>} : vector<8x128xbf16>, vector<128x128xbf16>, vector<8x128xf32> -> vector<8x128xf32>
    %c0_33 = arith.constant 0 : index
    %c0_34 = arith.constant 0 : index
    %44 = vector.load %arg13[%c0_33, %c0_34] : memref<1x128xf32, #tpu.memory_space<vmem>>, vector<1x128xf32>
    %45 = vector.broadcast %44 : vector<1x128xf32> to vector<8x128xf32>
    %46 = arith.addf %43, %45 : vector<8x128xf32>
    %cst_35 = arith.constant 0.000000e+00 : f32
    %47 = vector.broadcast %cst_35 : f32 to vector<8x128xf32>
    %48 = arith.maximumf %46, %47 : vector<8x128xf32>
    %c0_36 = arith.constant 0 : index
    %c0_37 = arith.constant 0 : index
    %49 = vector.load %arg14[%c0_36, %c0_37] : memref<1x128xf32, #tpu.memory_space<vmem>>, vector<1x128xf32>
    %50 = vector.broadcast %49 : vector<1x128xf32> to vector<8x128xf32>
    %51 = arith.mulf %48, %50 : vector<8x128xf32>
    %cst_38 = arith.constant dense<0.000000e+00> : vector<8xf32>
    %52 = vector.multi_reduction <add>, %51, %cst_38 [1] : vector<8x128xf32> to vector<8xf32>
    %53 = vector.shape_cast %52 : vector<8xf32> to vector<8x1xf32>
    %c0_39 = arith.constant 0 : index
    %c0_40 = arith.constant 0 : index
    %54 = vector.load %arg15[%c0_39, %c0_40] : memref<1x1xf32, #tpu.memory_space<vmem>>, vector<1x1xf32>
    %55 = vector.broadcast %54 : vector<1x1xf32> to vector<8x1xf32>
    %56 = arith.addf %53, %55 : vector<8x1xf32>
    %c0_41 = arith.constant 0 : index
    %c0_42 = arith.constant 0 : index
    %57 = vector.load %arg16[%c0_41, %c0_42] : memref<8x1xf32, #tpu.memory_space<vmem>>, vector<8x1xf32>
    tpu.vector_store %arg16[%c0_41, %c0_42], %56 {strides = array<i32>} : memref<8x1xf32, #tpu.memory_space<vmem>>, vector<8x1xf32>,
    return
  }
  func.func @transform_0(%arg0: i32) -> (i32, i32) {
    %c0_i32 = arith.constant 0 : i32
    %c0_i32_0 = arith.constant 0 : i32
    return %arg0, %c0_i32 : i32, i32
  }
  func.func @transform_1(%arg0: i32) -> (i32, i32) {
    %c0_i32 = arith.constant 0 : i32
    %c0_i32_0 = arith.constant 0 : i32
    %c0_i32_1 = arith.constant 0 : i32
    return %c0_i32, %c0_i32_0 : i32, i32
  }
  func.func @transform_2(%arg0: i32) -> (i32, i32) {
    %c0_i32 = arith.constant 0 : i32
    %c0_i32_0 = arith.constant 0 : i32
    %c0_i32_1 = arith.constant 0 : i32
    return %c0_i32, %c0_i32_0 : i32, i32
  }
  func.func @transform_3(%arg0: i32) -> (i32, i32) {
    %c0_i32 = arith.constant 0 : i32
    %c0_i32_0 = arith.constant 0 : i32
    %c0_i32_1 = arith.constant 0 : i32
    return %c0_i32, %c0_i32_0 : i32, i32
  }
  func.func @transform_4(%arg0: i32) -> (i32, i32) {
    %c0_i32 = arith.constant 0 : i32
    %c0_i32_0 = arith.constant 0 : i32
    %c0_i32_1 = arith.constant 0 : i32
    return %c0_i32, %c0_i32_0 : i32, i32
  }
  func.func @transform_5(%arg0: i32) -> (i32, i32) {
    %c0_i32 = arith.constant 0 : i32
    %c0_i32_0 = arith.constant 0 : i32
    %c0_i32_1 = arith.constant 0 : i32
    return %c0_i32, %c0_i32_0 : i32, i32
  }
  func.func @transform_6(%arg0: i32) -> (i32, i32) {
    %c0_i32 = arith.constant 0 : i32
    %c0_i32_0 = arith.constant 0 : i32
    %c0_i32_1 = arith.constant 0 : i32
    return %c0_i32, %c0_i32_0 : i32, i32
  }
  func.func @transform_7(%arg0: i32) -> (i32, i32) {
    %c0_i32 = arith.constant 0 : i32
    %c0_i32_0 = arith.constant 0 : i32
    %c0_i32_1 = arith.constant 0 : i32
    return %c0_i32, %c0_i32_0 : i32, i32
  }
  func.func @transform_8(%arg0: i32) -> (i32, i32) {
    %c0_i32 = arith.constant 0 : i32
    %c0_i32_0 = arith.constant 0 : i32
    %c0_i32_1 = arith.constant 0 : i32
    return %c0_i32, %c0_i32_0 : i32, i32
  }
  func.func @transform_9(%arg0: i32) -> (i32, i32) {
    %c0_i32 = arith.constant 0 : i32
    %c0_i32_0 = arith.constant 0 : i32
    %c0_i32_1 = arith.constant 0 : i32
    return %c0_i32, %c0_i32_0 : i32, i32
  }
  func.func @transform_10(%arg0: i32) -> (i32, i32) {
    %c0_i32 = arith.constant 0 : i32
    %c0_i32_0 = arith.constant 0 : i32
    %c0_i32_1 = arith.constant 0 : i32
    return %c0_i32, %c0_i32_0 : i32, i32
  }
  func.func @transform_11(%arg0: i32) -> (i32, i32) {
    %c0_i32 = arith.constant 0 : i32
    %c0_i32_0 = arith.constant 0 : i32
    %c0_i32_1 = arith.constant 0 : i32
    return %c0_i32, %c0_i32_0 : i32, i32
  }
  func.func @transform_12(%arg0: i32) -> (i32, i32) {
    %c0_i32 = arith.constant 0 : i32
    %c0_i32_0 = arith.constant 0 : i32
    %c0_i32_1 = arith.constant 0 : i32
    return %c0_i32, %c0_i32_0 : i32, i32
  }
  func.func @transform_13(%arg0: i32) -> (i32, i32) {
    %c0_i32 = arith.constant 0 : i32
    %c0_i32_0 = arith.constant 0 : i32
    %c0_i32_1 = arith.constant 0 : i32
    return %c0_i32, %c0_i32_0 : i32, i32
  }
  func.func @transform_14(%arg0: i32) -> (i32, i32) {
    %c0_i32 = arith.constant 0 : i32
    %c0_i32_0 = arith.constant 0 : i32
    %c0_i32_1 = arith.constant 0 : i32
    return %c0_i32, %c0_i32_0 : i32, i32
  }
  func.func @transform_15(%arg0: i32) -> (i32, i32) {
    %c0_i32 = arith.constant 0 : i32
    %c0_i32_0 = arith.constant 0 : i32
    return %arg0, %c0_i32 : i32, i32
  }
}

</mosaic_0001>

<llo_original>
// kernel: tpu_custom_call.1
$region0: #{tpu_custom_call.1}
  #allocation0 [shape = 'u32[]', space=smem, size = 0x4, offset = 0x4, fixed_abs, tag = 'smem constant byte address 0x4 - core index']
  #allocation1 [shape = 'u32[72,128]{1,0:T(1,128)}', space=vmem, size = 0x9000, scoped, tag = 'internal scratch']
  #allocation2 [shape = 'f32[1,1]{1,0:T(1,128)S(1)}', space=vmem, size = 0x200, scoped, tag = 'scoped memory for tpu_custom_call.1']
  %s0 = inlined_call_operand.hbm [shape: f32[8,128], index: 0, kind: input, shape index: {}]
  %s1 = inlined_call_operand.hbm [shape: bf16[128,128], index: 1, kind: input, shape index: {}]
  %s2 = inlined_call_operand.vmem [shape: f32[1,128], index: 2, kind: input, shape index: {}]
  %s3 = inlined_call_operand.hbm [shape: bf16[128,128], index: 3, kind: input, shape index: {}]
  %s4 = inlined_call_operand.vmem [shape: f32[1,128], index: 4, kind: input, shape index: {}]
  %s5 = inlined_call_operand.hbm [shape: bf16[128,128], index: 5, kind: input, shape index: {}]
  %s6 = inlined_call_operand.vmem [shape: f32[1,128], index: 6, kind: input, shape index: {}]
  %s7 = inlined_call_operand.hbm [shape: bf16[128,128], index: 7, kind: input, shape index: {}]
  %s8 = inlined_call_operand.vmem [shape: f32[1,128], index: 8, kind: input, shape index: {}]
  %s9 = inlined_call_operand.hbm [shape: bf16[128,128], index: 9, kind: input, shape index: {}]
  %s10 = inlined_call_operand.vmem [shape: f32[1,128], index: 10, kind: input, shape index: {}]
  %s11 = inlined_call_operand.hbm [shape: bf16[128,128], index: 11, kind: input, shape index: {}]
  %s12 = inlined_call_operand.vmem [shape: f32[1,128], index: 12, kind: input, shape index: {}]
  %s13 = inlined_call_operand.vmem [shape: f32[1,128], index: 13, kind: input, shape index: {}]
  %s14 = inlined_call_operand.<no memory space> [shape: f32[1,1], index: 14, kind: input, shape index: {}]
  %s15 = inlined_call_operand.vmem [shape: f32[8,1], index: 15, kind: output, shape index: {}]
  %s16 = sld [smem:[#allocation0]]
  $region98: #{tpu_custom_call.1} parent=0
    _
  %s18 = ssub.s32 1, %s16
  %s19 = scalar_select 0, %s18, %s16
  %v20 = vstv %s14
  %21 = vst [vmem:[#allocation2] sm:$0x1] %v20
  $region1: #{tpu_custom_call.1} parent=0
    #allocation3 [shape = 'u8[4096]{0}', space=vmem, size = 0x1000, scoped, tag = 'input window, operand 0, single buffered']
    #allocation4 [shape = 's32[1]{0}', space=sflag, size = 0x4, scoped, tag = 'scoped memory for tpu_custom_call.1']
    #allocation5 [shape = 'u8[32768]{0}', space=vmem, size = 0x8000, scoped, tag = 'input window, operand 1, single buffered']
    #allocation6 [shape = 's32[1]{0}', space=sflag, size = 0x4, scoped, tag = 'scoped memory for tpu_custom_call.1']
    #allocation7 [shape = 'u8[32768]{0}', space=vmem, size = 0x8000, scoped, tag = 'input window, operand 3, single buffered']
    #allocation8 [shape = 'u8[32768]{0}', space=vmem, size = 0x8000, scoped, tag = 'input window, operand 5, single buffered']
    #allocation9 [shape = 's32[1]{0}', space=sflag, size = 0x4, scoped, tag = 'scoped memory for tpu_custom_call.1']
    #allocation10 [shape = 'u8[32768]{0}', space=vmem, size = 0x8000, scoped, tag = 'input window, operand 7, single buffered']
    #allocation11 [shape = 'u8[32768]{0}', space=vmem, size = 0x8000, scoped, tag = 'input window, operand 9, single buffered']
    #allocation12 [shape = 's32[1]{0}', space=sflag, size = 0x4, scoped, tag = 'scoped memory for tpu_custom_call.1']
    #allocation13 [shape = 'u8[32768]{0}', space=vmem, size = 0x8000, scoped, tag = 'input window, operand 11, single buffered']
    %22 = vsyncpa [#allocation4], 0
    %23 = vsyncpa [#allocation6], 0
    %24 = vsyncpa [#allocation9], 0
    %25 = vsyncpa [#allocation12], 0
    // Predicated region
    $region2: #{tpu_custom_call.1} parent=1 // pred_check
      _
    $region3: #{tpu_custom_call.1} parent=1 // pred_check_branch
      %27 = sbr.rel (0) target = $region5
    $region4: #{tpu_custom_call.1} parent=1 // pred_region
      %29 = vsyncadd [#allocation4], 0
      %s31 = sshll.u32 %s0, 4
      %s32 = int_to_ptr.hbm [resolvable:$true] %s31
      %s33 = sshll.u32 [#allocation3], 4
      %s34 = int_to_ptr.vmem [resolvable:$true] %s33
      %36 = dma.hbm_to_vmem [thread:$0]  %s32, 128, %s34, [#allocation4]
    $region5: #{tpu_custom_call.1} parent=1 // pred_fallthru
      _
    // Predicated region
    $region6: #{tpu_custom_call.1} parent=1 // pred_check
      _
    $region7: #{tpu_custom_call.1} parent=1 // pred_check_branch
      %38 = sbr.rel (0) target = $region9
    $region8: #{tpu_custom_call.1} parent=1 // pred_region
      %40 = vsyncadd [#allocation6], 0
      %s41 = sshll.u32 %s1, 4
      %s42 = int_to_ptr.hbm [resolvable:$true] %s41
      %s43 = sshll.u32 [#allocation5], 4
      %s44 = int_to_ptr.vmem [resolvable:$true] %s43
      %49 = dma.hbm_to_vmem [thread:$0]  %s42, 1024, %s44, [#allocation6], 64, 64, 4
    $region9: #{tpu_custom_call.1} parent=1 // pred_fallthru
      _
    // Predicated region
    $region10: #{tpu_custom_call.1} parent=1 // pred_check
      _
    $region11: #{tpu_custom_call.1} parent=1 // pred_check_branch
      %51 = sbr.rel (0) target = $region13
    $region12: #{tpu_custom_call.1} parent=1 // pred_region
      _
    $region13: #{tpu_custom_call.1} parent=1 // pred_fallthru
      _
    // Predicated region
    $region14: #{tpu_custom_call.1} parent=1 // pred_check
      _
    $region15: #{tpu_custom_call.1} parent=1 // pred_check_branch
      %53 = sbr.rel (0) target = $region17
    $region16: #{tpu_custom_call.1} parent=1 // pred_region
      %55 = vsyncadd [#allocation6], 0
      %s56 = sshll.u32 %s3, 4
      %s57 = int_to_ptr.hbm [resolvable:$true] %s56
      %s58 = sshll.u32 [#allocation7], 4
      %s59 = int_to_ptr.vmem [resolvable:$true] %s58
      %64 = dma.hbm_to_vmem [thread:$0]  %s57, 1024, %s59, [#allocation6], 64, 64, 4
    $region17: #{tpu_custom_call.1} parent=1 // pred_fallthru
      _
    // Predicated region
    $region18: #{tpu_custom_call.1} parent=1 // pred_check
      _
    $region19: #{tpu_custom_call.1} parent=1 // pred_check_branch
      %66 = sbr.rel (0) target = $region21
    $region20: #{tpu_custom_call.1} parent=1 // pred_region
      _
    $region21: #{tpu_custom_call.1} parent=1 // pred_fallthru
      _
    // Predicated region
    $region22: #{tpu_custom_call.1} parent=1 // pred_check
      _
    $region23: #{tpu_custom_call.1} parent=1 // pred_check_branch
      %68 = sbr.rel (0) target = $region25
    $region24: #{tpu_custom_call.1} parent=1 // pred_region
      %70 = vsyncadd [#allocation9], 0
      %s71 = sshll.u32 %s5, 4
      %s72 = int_to_ptr.hbm [resolvable:$true] %s71
      %s73 = sshll.u32 [#allocation8], 4
      %s74 = int_to_ptr.vmem [resolvable:$true] %s73
      %79 = dma.hbm_to_vmem [thread:$0]  %s72, 1024, %s74, [#allocation9], 64, 64, 4
    $region25: #{tpu_custom_call.1} parent=1 // pred_fallthru
      _
    // Predicated region
    $region26: #{tpu_custom_call.1} parent=1 // pred_check
      _
    $region27: #{tpu_custom_call.1} parent=1 // pred_check_branch
      %81 = sbr.rel (0) target = $region29
    $region28: #{tpu_custom_call.1} parent=1 // pred_region
      _
    $region29: #{tpu_custom_call.1} parent=1 // pred_fallthru
      _
    // Predicated region
    $region30: #{tpu_custom_call.1} parent=1 // pred_check
      _
    $region31: #{tpu_custom_call.1} parent=1 // pred_check_branch
      %83 = sbr.rel (0) target = $region33
    $region32: #{tpu_custom_call.1} parent=1 // pred_region
      %85 = vsyncadd [#allocation9], 0
      %s86 = sshll.u32 %s7, 4
      %s87 = int_to_ptr.hbm [resolvable:$true] %s86
      %s88 = sshll.u32 [#allocation10], 4
      %s89 = int_to_ptr.vmem [resolvable:$true] %s88
      %94 = dma.hbm_to_vmem [thread:$0]  %s87, 1024, %s89, [#allocation9], 64, 64, 4
    $region33: #{tpu_custom_call.1} parent=1 // pred_fallthru
      _
    // Predicated region
    $region34: #{tpu_custom_call.1} parent=1 // pred_check
      _
    $region35: #{tpu_custom_call.1} parent=1 // pred_check_branch
      %96 = sbr.rel (0) target = $region37
    $region36: #{tpu_custom_call.1} parent=1 // pred_region
      _
    $region37: #{tpu_custom_call.1} parent=1 // pred_fallthru
      _
    // Predicated region
    $region38: #{tpu_custom_call.1} parent=1 // pred_check
      _
    $region39: #{tpu_custom_call.1} parent=1 // pred_check_branch
      %98 = sbr.rel (0) target = $region41
    $region40: #{tpu_custom_call.1} parent=1 // pred_region
      %100 = vsyncadd [#allocation12], 0
      %s101 = sshll.u32 %s9, 4
      %s102 = int_to_ptr.hbm [resolvable:$true] %s101
      %s103 = sshll.u32 [#allocation11], 4
      %s104 = int_to_ptr.vmem [resolvable:$true] %s103
      %109 = dma.hbm_to_vmem [thread:$0]  %s102, 1024, %s104, [#allocation12], 64, 64, 4
    $region41: #{tpu_custom_call.1} parent=1 // pred_fallthru
      _
    // Predicated region
    $region42: #{tpu_custom_call.1} parent=1 // pred_check
      _
    $region43: #{tpu_custom_call.1} parent=1 // pred_check_branch
      %111 = sbr.rel (0) target = $region45
    $region44: #{tpu_custom_call.1} parent=1 // pred_region
      _
    $region45: #{tpu_custom_call.1} parent=1 // pred_fallthru
      _
    // Predicated region
    $region46: #{tpu_custom_call.1} parent=1 // pred_check
      _
    $region47: #{tpu_custom_call.1} parent=1 // pred_check_branch
      %113 = sbr.rel (0) target = $region49
    $region48: #{tpu_custom_call.1} parent=1 // pred_region
      %115 = vsyncadd [#allocation12], 0
      %s116 = sshll.u32 %s11, 4
      %s117 = int_to_ptr.hbm [resolvable:$true] %s116
      %s118 = sshll.u32 [#allocation13], 4
      %s119 = int_to_ptr.vmem [resolvable:$true] %s118
      %124 = dma.hbm_to_vmem [thread:$0]  %s117, 1024, %s119, [#allocation12], 64, 64, 4
    $region49: #{tpu_custom_call.1} parent=1 // pred_fallthru
      _
    // Predicated region
    $region50: #{tpu_custom_call.1} parent=1 // pred_check
      _
    $region51: #{tpu_custom_call.1} parent=1 // pred_check_branch
      %126 = sbr.rel (0) target = $region53
    $region52: #{tpu_custom_call.1} parent=1 // pred_region
      _
    $region53: #{tpu_custom_call.1} parent=1 // pred_fallthru
      _
    // Predicated region
    $region54: #{tpu_custom_call.1} parent=1 // pred_check
      _
    $region55: #{tpu_custom_call.1} parent=1 // pred_check_branch
      %128 = sbr.rel (0) target = $region57
    $region56: #{tpu_custom_call.1} parent=1 // pred_region
      _
    $region57: #{tpu_custom_call.1} parent=1 // pred_fallthru
      _
    // Predicated region
    $region58: #{tpu_custom_call.1} parent=1 // pred_check
      _
    $region59: #{tpu_custom_call.1} parent=1 // pred_check_branch
      %130 = sbr.rel (0) target = $region61
    $region60: #{tpu_custom_call.1} parent=1 // pred_region
      _
    $region61: #{tpu_custom_call.1} parent=1 // pred_fallthru
      _
    // Predicated region
    $region62: #{tpu_custom_call.1} parent=1 // pred_check
      _
    $region63: #{tpu_custom_call.1} parent=1 // pred_check_branch
      %132 = sbr.rel (0) target = $region65
    $region64: #{tpu_custom_call.1} parent=1 // pred_region
      %134 = dma.done [#allocation4], 128
    $region65: #{tpu_custom_call.1} parent=1 // pred_fallthru
      _
    // Predicated region
    $region66: #{tpu_custom_call.1} parent=1 // pred_check
      _
    $region67: #{tpu_custom_call.1} parent=1 // pred_check_branch
      %136 = sbr.rel (0) target = $region69
    $region68: #{tpu_custom_call.1} parent=1 // pred_region
      %138 = dma.done [#allocation6], 1024
    $region69: #{tpu_custom_call.1} parent=1 // pred_fallthru
      _
    // Predicated region
    $region70: #{tpu_custom_call.1} parent=1 // pred_check
      _
    $region71: #{tpu_custom_call.1} parent=1 // pred_check_branch
      %140 = sbr.rel (0) target = $region73
    $region72: #{tpu_custom_call.1} parent=1 // pred_region
      %142 = dma.done [#allocation6], 1024
    $region73: #{tpu_custom_call.1} parent=1 // pred_fallthru
      _
    // Predicated region
    $region74: #{tpu_custom_call.1} parent=1 // pred_check
      _
    $region75: #{tpu_custom_call.1} parent=1 // pred_check_branch
      %144 = sbr.rel (0) target = $region77
    $region76: #{tpu_custom_call.1} parent=1 // pred_region
      %146 = dma.done [#allocation9], 1024
    $region77: #{tpu_custom_call.1} parent=1 // pred_fallthru
      _
    // Predicated region
    $region78: #{tpu_custom_call.1} parent=1 // pred_check
      _
    $region79: #{tpu_custom_call.1} parent=1 // pred_check_branch
      %148 = sbr.rel (0) target = $region81
    $region80: #{tpu_custom_call.1} parent=1 // pred_region
      %150 = dma.done [#allocation9], 1024
    $region81: #{tpu_custom_call.1} parent=1 // pred_fallthru
      _
    // Predicated region
    $region82: #{tpu_custom_call.1} parent=1 // pred_check
      _
    $region83: #{tpu_custom_call.1} parent=1 // pred_check_branch
      %152 = sbr.rel (0) target = $region85
    $region84: #{tpu_custom_call.1} parent=1 // pred_region
      %154 = dma.done [#allocation12], 1024
    $region85: #{tpu_custom_call.1} parent=1 // pred_fallthru
      _
    // Predicated region
    $region86: #{tpu_custom_call.1} parent=1 // pred_check
      _
    $region87: #{tpu_custom_call.1} parent=1 // pred_check_branch
      %156 = sbr.rel (0) target = $region89
    $region88: #{tpu_custom_call.1} parent=1 // pred_region
      %158 = dma.done [#allocation12], 1024
    $region89: #{tpu_custom_call.1} parent=1 // pred_fallthru
      _
    %v159 = vld [vmem:[#allocation3] sm:$0xff]
    %v160 = vpack.c.bf16 %v159, %v159
    %v161 = vld [vmem:[#allocation5] sm:$0xf]
    %v162 = vld [vmem:[#allocation5 + $0x4] sm:$0xf]
    %v163 = vld [vmem:[#allocation5 + $0x8] sm:$0xf]
    %v164 = vld [vmem:[#allocation5 + $0xc] sm:$0xf]
    %v165 = vld [vmem:[#allocation5 + $0x10] sm:$0xf]
    %v166 = vld [vmem:[#allocation5 + $0x14] sm:$0xf]
    %v167 = vld [vmem:[#allocation5 + $0x18] sm:$0xf]
    %v168 = vld [vmem:[#allocation5 + $0x1c] sm:$0xf]
    %v169 = vld [vmem:[#allocation5 + $0x20] sm:$0xf]
    %v170 = vld [vmem:[#allocation5 + $0x24] sm:$0xf]
    %v171 = vld [vmem:[#allocation5 + $0x28] sm:$0xf]
    %v172 = vld [vmem:[#allocation5 + $0x2c] sm:$0xf]
    %v173 = vld [vmem:[#allocation5 + $0x30] sm:$0xf]
    %v174 = vld [vmem:[#allocation5 + $0x34] sm:$0xf]
    %v175 = vld [vmem:[#allocation5 + $0x38] sm:$0xf]
    %v176 = vld [vmem:[#allocation5 + $0x3c] sm:$0xf]
    %v177 = vld [vmem:[%s2] sm:$0x1]
    %v179 = vperm.slane %v177, 0
    %v197 = vunpack.c.l.b16 %v161
    %v198 = vunpack.c.l.b16 %v162
    %v199 = vunpack.c.l.b16 %v163
    %v200 = vunpack.c.l.b16 %v164
    %v201 = vunpack.c.l.b16 %v165
    %v202 = vunpack.c.l.b16 %v166
    %v203 = vunpack.c.l.b16 %v167
    %v204 = vunpack.c.l.b16 %v168
    %v205 = vunpack.c.l.b16 %v169
    %v206 = vunpack.c.l.b16 %v170
    %v207 = vunpack.c.l.b16 %v171
    %v208 = vunpack.c.l.b16 %v172
    %v209 = vunpack.c.l.b16 %v173
    %v210 = vunpack.c.l.b16 %v174
    %v211 = vunpack.c.l.b16 %v175
    %v212 = vunpack.c.l.b16 %v176
    %v213 = vpack.c.b16 %v198, %v197
    %v214 = vpack.c.b16 %v200, %v199
    %v215 = vpack.c.b16 %v202, %v201
    %v216 = vpack.c.b16 %v204, %v203
    %v217 = vpack.c.b16 %v206, %v205
    %v218 = vpack.c.b16 %v208, %v207
    %v219 = vpack.c.b16 %v210, %v209
    %v220 = vpack.c.b16 %v212, %v211
    %229 = vmatpush.bf16.msra.mxu0 %v220
    %230 = vmatpush.bf16.msra.mxu0 %v219
    %231 = vmatpush.bf16.msra.mxu0 %v218
    %232 = vmatpush.bf16.msra.mxu0 %v217
    %233 = vmatpush.bf16.msra.mxu0 %v216
    %234 = vmatpush.bf16.msra.mxu0 %v215
    %235 = vmatpush.bf16.msra.mxu0 %v214
    %236 = vmatpush.bf16.msra.mxu0 %v213
    %237 = vmatmul.bf16.gmra.mxu0 %v160
    %v238 = vpop.f32.mrf.mxu0
    %v239 = vadd.f32 %v179, %v238
    %v240 = vpop.f32.mrf.mxu0
    %241 = vdwg.mxu0
    %v242 = vmax.f32 %v239, 0.0
    %v243 = vpack.c.bf16 %v242, %v242
    %v244 = vld [vmem:[#allocation7] sm:$0xf]
    %v245 = vld [vmem:[#allocation7 + $0x4] sm:$0xf]
    %v246 = vld [vmem:[#allocation7 + $0x8] sm:$0xf]
    %v247 = vld [vmem:[#allocation7 + $0xc] sm:$0xf]
    %v248 = vld [vmem:[#allocation7 + $0x10] sm:$0xf]
    %v249 = vld [vmem:[#allocation7 + $0x14] sm:$0xf]
    %v250 = vld [vmem:[#allocation7 + $0x18] sm:$0xf]
    %v251 = vld [vmem:[#allocation7 + $0x1c] sm:$0xf]
    %v252 = vld [vmem:[#allocation7 + $0x20] sm:$0xf]
    %v253 = vld [vmem:[#allocation7 + $0x24] sm:$0xf]
    %v254 = vld [vmem:[#allocation7 + $0x28] sm:$0xf]
    %v255 = vld [vmem:[#allocation7 + $0x2c] sm:$0xf]
    %v256 = vld [vmem:[#allocation7 + $0x30] sm:$0xf]
    %v257 = vld [vmem:[#allocation7 + $0x34] sm:$0xf]
    %v258 = vld [vmem:[#allocation7 + $0x38] sm:$0xf]
    %v259 = vld [vmem:[#allocation7 + $0x3c] sm:$0xf]
    %v260 = vld [vmem:[%s4] sm:$0x1]
    %v262 = vperm.slane %v260, 0
    %v280 = vunpack.c.l.b16 %v244
    %v281 = vunpack.c.l.b16 %v245
    %v282 = vunpack.c.l.b16 %v246
    %v283 = vunpack.c.l.b16 %v247
    %v284 = vunpack.c.l.b16 %v248
    %v285 = vunpack.c.l.b16 %v249
    %v286 = vunpack.c.l.b16 %v250
    %v287 = vunpack.c.l.b16 %v251
    %v288 = vunpack.c.l.b16 %v252
    %v289 = vunpack.c.l.b16 %v253
    %v290 = vunpack.c.l.b16 %v254
    %v291 = vunpack.c.l.b16 %v255
    %v292 = vunpack.c.l.b16 %v256
    %v293 = vunpack.c.l.b16 %v257
    %v294 = vunpack.c.l.b16 %v258
    %v295 = vunpack.c.l.b16 %v259
    %v296 = vpack.c.b16 %v281, %v280
    %v297 = vpack.c.b16 %v283, %v282
    %v298 = vpack.c.b16 %v285, %v284
    %v299 = vpack.c.b16 %v287, %v286
    %v300 = vpack.c.b16 %v289, %v288
    %v301 = vpack.c.b16 %v291, %v290
    %v302 = vpack.c.b16 %v293, %v292
    %v303 = vpack.c.b16 %v295, %v294
    %312 = vmatpush.bf16.msra.mxu0 %v303
    %313 = vmatpush.bf16.msra.mxu0 %v302
    %314 = vmatpush.bf16.msra.mxu0 %v301
    %315 = vmatpush.bf16.msra.mxu0 %v300
    %316 = vmatpush.bf16.msra.mxu0 %v299
    %317 = vmatpush.bf16.msra.mxu0 %v298
    %318 = vmatpush.bf16.msra.mxu0 %v297
    %319 = vmatpush.bf16.msra.mxu0 %v296
    %320 = vmatmul.bf16.gmra.mxu0 %v243
    %v321 = vpop.f32.mrf.mxu0
    %v322 = vadd.f32 %v262, %v321
    %v323 = vpop.f32.mrf.mxu0
    %324 = vdwg.mxu0
    %v325 = vmax.f32 %v322, 0.0
    %v326 = vpack.c.bf16 %v325, %v325
    %v327 = vld [vmem:[#allocation8] sm:$0xf]
    %v328 = vld [vmem:[#allocation8 + $0x4] sm:$0xf]
    %v329 = vld [vmem:[#allocation8 + $0x8] sm:$0xf]
    %v330 = vld [vmem:[#allocation8 + $0xc] sm:$0xf]
    %v331 = vld [vmem:[#allocation8 + $0x10] sm:$0xf]
    %v332 = vld [vmem:[#allocation8 + $0x14] sm:$0xf]
    %v333 = vld [vmem:[#allocation8 + $0x18] sm:$0xf]
    %v334 = vld [vmem:[#allocation8 + $0x1c] sm:$0xf]
    %v335 = vld [vmem:[#allocation8 + $0x20] sm:$0xf]
    %v336 = vld [vmem:[#allocation8 + $0x24] sm:$0xf]
    %v337 = vld [vmem:[#allocation8 + $0x28] sm:$0xf]
    %v338 = vld [vmem:[#allocation8 + $0x2c] sm:$0xf]
    %v339 = vld [vmem:[#allocation8 + $0x30] sm:$0xf]
    %v340 = vld [vmem:[#allocation8 + $0x34] sm:$0xf]
    %v341 = vld [vmem:[#allocation8 + $0x38] sm:$0xf]
    %v342 = vld [vmem:[#allocation8 + $0x3c] sm:$0xf]
    %v343 = vld [vmem:[%s6] sm:$0x1]
    %v345 = vperm.slane %v343, 0
    %v363 = vunpack.c.l.b16 %v327
    %v364 = vunpack.c.l.b16 %v328
    %v365 = vunpack.c.l.b16 %v329
    %v366 = vunpack.c.l.b16 %v330
    %v367 = vunpack.c.l.b16 %v331
    %v368 = vunpack.c.l.b16 %v332
    %v369 = vunpack.c.l.b16 %v333
    %v370 = vunpack.c.l.b16 %v334
    %v371 = vunpack.c.l.b16 %v335
    %v372 = vunpack.c.l.b16 %v336
    %v373 = vunpack.c.l.b16 %v337
    %v374 = vunpack.c.l.b16 %v338
    %v375 = vunpack.c.l.b16 %v339
    %v376 = vunpack.c.l.b16 %v340
    %v377 = vunpack.c.l.b16 %v341
    %v378 = vunpack.c.l.b16 %v342
    %v379 = vpack.c.b16 %v364, %v363
    %v380 = vpack.c.b16 %v366, %v365
    %v381 = vpack.c.b16 %v368, %v367
    %v382 = vpack.c.b16 %v370, %v369
    %v383 = vpack.c.b16 %v372, %v371
    %v384 = vpack.c.b16 %v374, %v373
    %v385 = vpack.c.b16 %v376, %v375
    %v386 = vpack.c.b16 %v378, %v377
    %395 = vmatpush.bf16.msra.mxu0 %v386
    %396 = vmatpush.bf16.msra.mxu0 %v385
    %397 = vmatpush.bf16.msra.mxu0 %v384
    %398 = vmatpush.bf16.msra.mxu0 %v383
    %399 = vmatpush.bf16.msra.mxu0 %v382
    %400 = vmatpush.bf16.msra.mxu0 %v381
    %401 = vmatpush.bf16.msra.mxu0 %v380
    %402 = vmatpush.bf16.msra.mxu0 %v379
    %403 = vmatmul.bf16.gmra.mxu0 %v326
    %v404 = vpop.f32.mrf.mxu0
    %v405 = vadd.f32 %v345, %v404
    %v406 = vpop.f32.mrf.mxu0
    %407 = vdwg.mxu0
    %v408 = vmax.f32 %v405, 0.0
    %v409 = vpack.c.bf16 %v408, %v408
    %v410 = vld [vmem:[#allocation10] sm:$0xf]
    %v411 = vld [vmem:[#allocation10 + $0x4] sm:$0xf]
    %v412 = vld [vmem:[#allocation10 + $0x8] sm:$0xf]
    %v413 = vld [vmem:[#allocation10 + $0xc] sm:$0xf]
    %v414 = vld [vmem:[#allocation10 + $0x10] sm:$0xf]
    %v415 = vld [vmem:[#allocation10 + $0x14] sm:$0xf]
    %v416 = vld [vmem:[#allocation10 + $0x18] sm:$0xf]
    %v417 = vld [vmem:[#allocation10 + $0x1c] sm:$0xf]
    %v418 = vld [vmem:[#allocation10 + $0x20] sm:$0xf]
    %v419 = vld [vmem:[#allocation10 + $0x24] sm:$0xf]
    %v420 = vld [vmem:[#allocation10 + $0x28] sm:$0xf]
    %v421 = vld [vmem:[#allocation10 + $0x2c] sm:$0xf]
    %v422 = vld [vmem:[#allocation10 + $0x30] sm:$0xf]
    %v423 = vld [vmem:[#allocation10 + $0x34] sm:$0xf]
    %v424 = vld [vmem:[#allocation10 + $0x38] sm:$0xf]
    %v425 = vld [vmem:[#allocation10 + $0x3c] sm:$0xf]
    %v426 = vld [vmem:[%s8] sm:$0x1]
    %v428 = vperm.slane %v426, 0
    %v446 = vunpack.c.l.b16 %v410
    %v447 = vunpack.c.l.b16 %v411
    %v448 = vunpack.c.l.b16 %v412
    %v449 = vunpack.c.l.b16 %v413
    %v450 = vunpack.c.l.b16 %v414
    %v451 = vunpack.c.l.b16 %v415
    %v452 = vunpack.c.l.b16 %v416
    %v453 = vunpack.c.l.b16 %v417
    %v454 = vunpack.c.l.b16 %v418
    %v455 = vunpack.c.l.b16 %v419
    %v456 = vunpack.c.l.b16 %v420
    %v457 = vunpack.c.l.b16 %v421
    %v458 = vunpack.c.l.b16 %v422
    %v459 = vunpack.c.l.b16 %v423
    %v460 = vunpack.c.l.b16 %v424
    %v461 = vunpack.c.l.b16 %v425
    %v462 = vpack.c.b16 %v447, %v446
    %v463 = vpack.c.b16 %v449, %v448
    %v464 = vpack.c.b16 %v451, %v450
    %v465 = vpack.c.b16 %v453, %v452
    %v466 = vpack.c.b16 %v455, %v454
    %v467 = vpack.c.b16 %v457, %v456
    %v468 = vpack.c.b16 %v459, %v458
    %v469 = vpack.c.b16 %v461, %v460
    %478 = vmatpush.bf16.msra.mxu0 %v469
    %479 = vmatpush.bf16.msra.mxu0 %v468
    %480 = vmatpush.bf16.msra.mxu0 %v467
    %481 = vmatpush.bf16.msra.mxu0 %v466
    %482 = vmatpush.bf16.msra.mxu0 %v465
    %483 = vmatpush.bf16.msra.mxu0 %v464
    %484 = vmatpush.bf16.msra.mxu0 %v463
    %485 = vmatpush.bf16.msra.mxu0 %v462
    %486 = vmatmul.bf16.gmra.mxu0 %v409
    %v487 = vpop.f32.mrf.mxu0
    %v488 = vadd.f32 %v428, %v487
    %v489 = vpop.f32.mrf.mxu0
    %490 = vdwg.mxu0
    %v491 = vmax.f32 %v488, 0.0
    %v492 = vpack.c.bf16 %v491, %v491
    %v493 = vld [vmem:[#allocation11] sm:$0xf]
    %v494 = vld [vmem:[#allocation11 + $0x4] sm:$0xf]
    %v495 = vld [vmem:[#allocation11 + $0x8] sm:$0xf]
    %v496 = vld [vmem:[#allocation11 + $0xc] sm:$0xf]
    %v497 = vld [vmem:[#allocation11 + $0x10] sm:$0xf]
    %v498 = vld [vmem:[#allocation11 + $0x14] sm:$0xf]
    %v499 = vld [vmem:[#allocation11 + $0x18] sm:$0xf]
    %v500 = vld [vmem:[#allocation11 + $0x1c] sm:$0xf]
    %v501 = vld [vmem:[#allocation11 + $0x20] sm:$0xf]
    %v502 = vld [vmem:[#allocation11 + $0x24] sm:$0xf]
    %v503 = vld [vmem:[#allocation11 + $0x28] sm:$0xf]
    %v504 = vld [vmem:[#allocation11 + $0x2c] sm:$0xf]
    %v505 = vld [vmem:[#allocation11 + $0x30] sm:$0xf]
    %v506 = vld [vmem:[#allocation11 + $0x34] sm:$0xf]
    %v507 = vld [vmem:[#allocation11 + $0x38] sm:$0xf]
    %v508 = vld [vmem:[#allocation11 + $0x3c] sm:$0xf]
    %v509 = vld [vmem:[%s10] sm:$0x1]
    %v511 = vperm.slane %v509, 0
    %v529 = vunpack.c.l.b16 %v493
    %v530 = vunpack.c.l.b16 %v494
    %v531 = vunpack.c.l.b16 %v495
    %v532 = vunpack.c.l.b16 %v496
    %v533 = vunpack.c.l.b16 %v497
    %v534 = vunpack.c.l.b16 %v498
    %v535 = vunpack.c.l.b16 %v499
    %v536 = vunpack.c.l.b16 %v500
    %v537 = vunpack.c.l.b16 %v501
    %v538 = vunpack.c.l.b16 %v502
    %v539 = vunpack.c.l.b16 %v503
    %v540 = vunpack.c.l.b16 %v504
    %v541 = vunpack.c.l.b16 %v505
    %v542 = vunpack.c.l.b16 %v506
    %v543 = vunpack.c.l.b16 %v507
    %v544 = vunpack.c.l.b16 %v508
    %v545 = vpack.c.b16 %v530, %v529
    %v546 = vpack.c.b16 %v532, %v531
    %v547 = vpack.c.b16 %v534, %v533
    %v548 = vpack.c.b16 %v536, %v535
    %v549 = vpack.c.b16 %v538, %v537
    %v550 = vpack.c.b16 %v540, %v539
    %v551 = vpack.c.b16 %v542, %v541
    %v552 = vpack.c.b16 %v544, %v543
    %561 = vmatpush.bf16.msra.mxu0 %v552
    %562 = vmatpush.bf16.msra.mxu0 %v551
    %563 = vmatpush.bf16.msra.mxu0 %v550
    %564 = vmatpush.bf16.msra.mxu0 %v549
    %565 = vmatpush.bf16.msra.mxu0 %v548
    %566 = vmatpush.bf16.msra.mxu0 %v547
    %567 = vmatpush.bf16.msra.mxu0 %v546
    %568 = vmatpush.bf16.msra.mxu0 %v545
    %569 = vmatmul.bf16.gmra.mxu0 %v492
    %v570 = vpop.f32.mrf.mxu0
    %v571 = vadd.f32 %v511, %v570
    %v572 = vpop.f32.mrf.mxu0
    %573 = vdwg.mxu0
    %v574 = vmax.f32 %v571, 0.0
    %v575 = vpack.c.bf16 %v574, %v574
    %v576 = vld [vmem:[#allocation13] sm:$0xf]
    %v577 = vld [vmem:[#allocation13 + $0x4] sm:$0xf]
    %v578 = vld [vmem:[#allocation13 + $0x8] sm:$0xf]
    %v579 = vld [vmem:[#allocation13 + $0xc] sm:$0xf]
    %v580 = vld [vmem:[#allocation13 + $0x10] sm:$0xf]
    %v581 = vld [vmem:[#allocation13 + $0x14] sm:$0xf]
    %v582 = vld [vmem:[#allocation13 + $0x18] sm:$0xf]
    %v583 = vld [vmem:[#allocation13 + $0x1c] sm:$0xf]
    %v584 = vld [vmem:[#allocation13 + $0x20] sm:$0xf]
    %v585 = vld [vmem:[#allocation13 + $0x24] sm:$0xf]
    %v586 = vld [vmem:[#allocation13 + $0x28] sm:$0xf]
    %v587 = vld [vmem:[#allocation13 + $0x2c] sm:$0xf]
    %v588 = vld [vmem:[#allocation13 + $0x30] sm:$0xf]
    %v589 = vld [vmem:[#allocation13 + $0x34] sm:$0xf]
    %v590 = vld [vmem:[#allocation13 + $0x38] sm:$0xf]
    %v591 = vld [vmem:[#allocation13 + $0x3c] sm:$0xf]
    %v592 = vld [vmem:[%s12] sm:$0x1]
    %v594 = vperm.slane %v592, 0
    %v612 = vunpack.c.l.b16 %v576
    %v613 = vunpack.c.l.b16 %v577
    %v614 = vunpack.c.l.b16 %v578
    %v615 = vunpack.c.l.b16 %v579
    %v616 = vunpack.c.l.b16 %v580
    %v617 = vunpack.c.l.b16 %v581
    %v618 = vunpack.c.l.b16 %v582
    %v619 = vunpack.c.l.b16 %v583
    %v620 = vunpack.c.l.b16 %v584
    %v621 = vunpack.c.l.b16 %v585
    %v622 = vunpack.c.l.b16 %v586
    %v623 = vunpack.c.l.b16 %v587
    %v624 = vunpack.c.l.b16 %v588
    %v625 = vunpack.c.l.b16 %v589
    %v626 = vunpack.c.l.b16 %v590
    %v627 = vunpack.c.l.b16 %v591
    %v628 = vpack.c.b16 %v613, %v612
    %v629 = vpack.c.b16 %v615, %v614
    %v630 = vpack.c.b16 %v617, %v616
    %v631 = vpack.c.b16 %v619, %v618
    %v632 = vpack.c.b16 %v621, %v620
    %v633 = vpack.c.b16 %v623, %v622
    %v634 = vpack.c.b16 %v625, %v624
    %v635 = vpack.c.b16 %v627, %v626
    %644 = vmatpush.bf16.msra.mxu0 %v635
    %645 = vmatpush.bf16.msra.mxu0 %v634
    %646 = vmatpush.bf16.msra.mxu0 %v633
    %647 = vmatpush.bf16.msra.mxu0 %v632
    %648 = vmatpush.bf16.msra.mxu0 %v631
    %649 = vmatpush.bf16.msra.mxu0 %v630
    %650 = vmatpush.bf16.msra.mxu0 %v629
    %651 = vmatpush.bf16.msra.mxu0 %v628
    %652 = vmatmul.bf16.gmra.mxu0 %v575
    %v653 = vpop.f32.mrf.mxu0
    %v654 = vadd.f32 %v594, %v653
    %v655 = vpop.f32.mrf.mxu0
    %656 = vdwg.mxu0
    %v657 = vmax.f32 %v654, 0.0
    %v658 = vld [vmem:[%s13] sm:$0x1]
    %v660 = vperm.slane %v658, 0
    %v662 = vmul.f32 %v657, %v660
    %663 = vadd.xlane.f32.xlu0 %v662
    %v664 = vpop.xlane.xlu0 %663
    %v665 = vld [vmem:[#allocation2] sm:$0x1]
    %v667 = vperm.slane %v665, 0
    %v669 = vadd.f32 %v664, %v667
    %vm670 = vcmask 7168
    %671 = vst.msk [vmem:[%s15] sm:$0xff] %vm670, %v669
    // Predicated region
    $region90: #{tpu_custom_call.1} parent=1 // pred_check
      _
    $region91: #{tpu_custom_call.1} parent=1 // pred_check_branch
      %673 = sbr.rel (0) target = $region93
    $region92: #{tpu_custom_call.1} parent=1 // pred_region
      _
    $region93: #{tpu_custom_call.1} parent=1 // pred_fallthru
      _
    // Predicated region
    $region94: #{tpu_custom_call.1} parent=1 // pred_check
      _
    $region95: #{tpu_custom_call.1} parent=1 // pred_check_branch
      %675 = sbr.rel (0) target = $region97
    $region96: #{tpu_custom_call.1} parent=1 // pred_region
      _
    $region97: #{tpu_custom_call.1} parent=1 // pred_fallthru
      _
    %676 = vsyncpa [#allocation4], 1
    %677 = vsyncpa [#allocation6], 1
    %678 = vsyncpa [#allocation9], 1
    %679 = vsyncpa [#allocation12], 1

</llo_original>
